<compile_context>
chip_gen: v7x
topology: tpu7x:2x2x1
jax: 0.10.0
libtpu: 0.0.40
codegen_flags: <defaults>
</compile_context>

<pallas_src>
import numpy as np
import jax
import jax.numpy as jnp
from jax import lax
from jax.experimental import pallas as pl
from jax.experimental.pallas import tpu as pltpu

_LANE = 128


def _lane_pack(W, C):
    """How many images to pack side-by-side along lanes to reach a 128-lane-dense layout."""
    wc = W * C
    if wc >= _LANE or _LANE % wc != 0:
        return 1
    return _LANE // wc


def _make_fused_block_kernel(H, lanes):
    def kernel(x_ref, t1_ref, b1_ref, t2_ref, b2_ref, out_ref, pad_ref):
        # Zero only the two halo rows; interior rows are fully overwritten every step,
        # so no full-buffer memset and no program_id-gated init (megacore-safe).
        zrow = jnp.zeros((1, lanes), jnp.float32)
        pad_ref[0:1, :] = zrow
        pad_ref[H + 1:H + 2, :] = zrow

        x = x_ref[0]                                  # (H, lanes) f32, lane-dense
        pad_ref[1:H + 1, :] = x                       # halo rows stay zero

        def conv(t_ref):
            # 3 bf16 MXU matmuls (one per kernel row), f32 accumulation.
            acc = jnp.dot(pad_ref[0:H, :].astype(jnp.bfloat16), t_ref[0],
                          preferred_element_type=jnp.float32)
            for kh in (1, 2):
                acc = acc + jnp.dot(pad_ref[kh:kh + H, :].astype(jnp.bfloat16),
                                    t_ref[kh], preferred_element_type=jnp.float32)
            return acc

        # conv1 + bn1 (scale folded into t1) + relu — stays in VMEM.
        hidden = jnp.maximum(conv(t1_ref) + b1_ref[...], 0.0)
        pad_ref[1:H + 1, :] = hidden                  # conv2 input, halo rows still zero

        # conv2 + bn2 bias + identity shortcut + relu.
        out = conv(t2_ref) + b2_ref[...] + x
        out_ref[0] = jnp.maximum(out, 0.0)

    return kernel


def _fold_bn(gamma, beta, mean, var, eps=1e-5):
    scale = gamma / jnp.sqrt(var + eps)
    bias = beta - mean * scale
    return scale, bias


def _row_toeplitz_nopad(w_hwio, W):
    """(3,3,Cin,Cout) -> (3, W*Cin, W*Cout) block-Toeplitz over the width axis.

    Width zero-padding is folded in by dropping out-of-range taps at the left/right
    boundary (their contribution is exactly the zero padding), so K = W*Cin stays
    8-aligned and no halo columns are materialized in the kernel:
        conv3x3(x)[h, w*Cout+co] = sum_kh rowpad[h+kh, :] @ T[kh]
    with rowpad[r, ip*Cin+ci] = x[r-1, ip, ci] for 1<=r<=H, zero rows at r = 0, H+1.
    """
    KH, KW, Cin, Cout = w_hwio.shape
    sel = np.zeros((KW, W, W), np.float32)
    for kw in range(KW):
        for w in range(W):
            ip = w + kw - 1
            if 0 <= ip < W:
                sel[kw, w, ip] = 1.0
    t = jnp.einsum("awp,haio->hpiwo", jnp.asarray(sel), w_hwio.astype(jnp.float32))
    return t.reshape(KH, W * Cin, W * Cout)


def _block_diag(t, lp):
    """(KH,K,N) -> (KH, lp*K, lp*N) block-diagonal: lane-packs lp images per matmul."""
    if lp == 1:
        return t
    KH, K, N = t.shape
    z = jnp.zeros((KH, K, N), t.dtype)
    rows = [jnp.concatenate([t if j == i else z for j in range(lp)], axis=2)
            for i in range(lp)]
    return jnp.concatenate(rows, axis=1)


def prepare_block_params(params, W):
    """One-time (per-checkpoint) weight prep: BN fold, block-Toeplitz, lane pack, bf16 cast."""
    C = params["w1"].shape[2]
    lp = _lane_pack(W, C)
    s1, b1 = _fold_bn(*params["bn1"])
    s2, b2 = _fold_bn(*params["bn2"])
    t1 = _row_toeplitz_nopad(params["w1"], W) * jnp.tile(s1, W)   # fold BN scale per out lane
    t2 = _row_toeplitz_nopad(params["w2"], W) * jnp.tile(s2, W)
    return {
        "t1": _block_diag(t1, lp).astype(jnp.bfloat16),           # (3, lp*W*C, lp*W*C)
        "t2": _block_diag(t2, lp).astype(jnp.bfloat16),
        "b1": jnp.tile(b1, W * lp).reshape(1, lp * W * C).astype(jnp.float32),
        "b2": jnp.tile(b2, W * lp).reshape(1, lp * W * C).astype(jnp.float32),
    }


@jax.jit
def basic_block_enc(x_nchw, prep):
    N, C, H, W = x_nchw.shape
    lp = _lane_pack(W, C)
    assert N % lp == 0, "batch must be divisible by the lane-pack factor"
    lanes = lp * W * C
    ng = N // lp

    # NCHW -> lane-dense packed (ng, H, lp*W*C): lp images side-by-side along lanes.
    x2d = jnp.transpose(x_nchw, (0, 2, 3, 1)).astype(jnp.float32).reshape(N, H, W * C)
    xp = x2d.reshape(ng, lp, H, W * C).transpose(0, 2, 1, 3).reshape(ng, H, lanes)

    kernel = _make_fused_block_kernel(H, lanes)

    out = pl.pallas_call(
        kernel,
        out_shape=jax.ShapeDtypeStruct((ng, H, lanes), jnp.float32),
        grid_spec=pltpu.PrefetchScalarGridSpec(
            num_scalar_prefetch=0,
            grid=(ng,),
            in_specs=[
                pl.BlockSpec((1, H, lanes), lambda n: (n, 0, 0)),
                pl.BlockSpec((3, lanes, lanes), lambda n: (0, 0, 0)),
                pl.BlockSpec((1, lanes), lambda n: (0, 0)),
                pl.BlockSpec((3, lanes, lanes), lambda n: (0, 0, 0)),
                pl.BlockSpec((1, lanes), lambda n: (0, 0)),
            ],
            out_specs=pl.BlockSpec((1, H, lanes), lambda n: (n, 0, 0)),
            scratch_shapes=[pltpu.VMEM((H + 2, lanes), jnp.float32)],
        ),
        compiler_params=pltpu.CompilerParams(
            dimension_semantics=("parallel",)),
    )(xp, prep["t1"], prep["b1"], prep["t2"], prep["b2"])

    # Unpack lanes back to NCHW.
    o2d = out.reshape(ng, H, lp, W * C).transpose(0, 2, 1, 3).reshape(N, H, W, C)
    return jnp.transpose(o2d, (0, 3, 1, 2))


def reference_basic_block_enc(x_nchw, params):
    """Pure-JAX f32 reference (NHWC convs) for correctness checking."""
    x = jnp.transpose(x_nchw, (0, 2, 3, 1)).astype(jnp.float32)
    dn = ("NHWC", "HWIO", "NHWC")

    def conv(a, w):
        return lax.conv_general_dilated(a, w, (1, 1), ((1, 1), (1, 1)),
                                        dimension_numbers=dn)

    s1, b1 = _fold_bn(*params["bn1"])
    s2, b2 = _fold_bn(*params["bn2"])
    out = jax.nn.relu(conv(x, params["w1"]) * s1 + b1)
    out = conv(out, params["w2"]) * s2 + b2
    out = jax.nn.relu(out + x)
    return jnp.transpose(out, (0, 3, 1, 2))


if __name__ == "__main__":
    # BasicBlockEnc(in_planes=4, stride=1): planes = 4.
    N, C, H, W = 2, 4, 16, 16

    key = jax.random.PRNGKey(0)
    ks = jax.random.split(key, 11)

    params = {
        # conv weights in HWIO layout (3,3,Cin,Cout)
        "w1": jax.random.normal(ks[0], (3, 3, C, C), jnp.float32) * 0.1,
        "w2": jax.random.normal(ks[1], (3, 3, C, C), jnp.float32) * 0.1,
        # bn params: (gamma, beta, running_mean, running_var)
        "bn1": (
            1.0 + 0.1 * jax.random.normal(ks[2], (C,), jnp.float32),
            0.1 * jax.random.normal(ks[3], (C,), jnp.float32),
            0.1 * jax.random.normal(ks[4], (C,), jnp.float32),
            0.5 + jnp.abs(jax.random.normal(ks[5], (C,), jnp.float32)),
        ),
        "bn2": (
            1.0 + 0.1 * jax.random.normal(ks[6], (C,), jnp.float32),
            0.1 * jax.random.normal(ks[7], (C,), jnp.float32),
            0.1 * jax.random.normal(ks[8], (C,), jnp.float32),
            0.5 + jnp.abs(jax.random.normal(ks[9], (C,), jnp.float32)),
        ),
    }

    x = jax.random.normal(ks[10], (N, C, H, W), jnp.float32)

    prep = prepare_block_params(params, W)      # one-time weight prep (hoisted off hot path)
    out = basic_block_enc(x, prep)
    out = jax.block_until_ready(out)

    ref = reference_basic_block_enc(x, params)
    assert out.shape == (N, C, H, W)
    # bf16 MXU operands with f32 accumulation -> loosened tolerance vs. the f32 reference.
    assert jnp.allclose(out, ref, atol=5e-2, rtol=5e-2), (
        float(jnp.max(jnp.abs(out - ref))))

    print("KERNEL_OK")
</pallas_src>

<mosaic_0001>
module attributes {stable_mosaic.version = 11 : i64} {
  func.func @kernel(%arg0: i32, %arg1: memref<1x16x128xf32, #tpu.memory_space<vmem>>, %arg2: memref<3x128x128xbf16, #tpu.memory_space<vmem>>, %arg3: memref<1x128xf32, #tpu.memory_space<vmem>>, %arg4: memref<3x128x128xbf16, #tpu.memory_space<vmem>>, %arg5: memref<1x128xf32, #tpu.memory_space<vmem>>, %arg6: memref<1x16x128xf32, #tpu.memory_space<vmem>>, %arg7: memref<18x128xf32, #tpu.memory_space<vmem>>) attributes {dimension_semantics = [#tpu.dimension_semantics<parallel>], iteration_bounds = array<i64: 1>, scalar_prefetch = 0 : i64, scratch_operands = 1 : i64, tpu.core_type = #tpu.core_type<tc>, window_params = [{transform_indices = @transform_0, window_bounds = array<i64: 1, 16, 128>}, {pipeline_mode = #tpu.pipeline_mode<synchronous>, transform_indices = @transform_1, window_bounds = array<i64: 3, 128, 128>}, {pipeline_mode = #tpu.pipeline_mode<synchronous>, transform_indices = @transform_2, window_bounds = array<i64: 1, 128>}, {pipeline_mode = #tpu.pipeline_mode<synchronous>, transform_indices = @transform_3, window_bounds = array<i64: 3, 128, 128>}, {pipeline_mode = #tpu.pipeline_mode<synchronous>, transform_indices = @transform_4, window_bounds = array<i64: 1, 128>}, {transform_indices = @transform_5, window_bounds = array<i64: 1, 16, 128>}]} {
    %cst = arith.constant 0.000000e+00 : f32
    %0 = vector.broadcast %cst : f32 to vector<1x128xf32>
    %c0 = arith.constant 0 : index
    %c0_0 = arith.constant 0 : index
    %1 = vector.load %arg7[%c0, %c0_0] : memref<18x128xf32, #tpu.memory_space<vmem>>, vector<1x128xf32>
    tpu.vector_store %arg7[%c0, %c0_0], %0 {strides = array<i32>} : memref<18x128xf32, #tpu.memory_space<vmem>>, vector<1x128xf32>,
    %c17 = arith.constant 17 : index
    %c0_1 = arith.constant 0 : index
    %2 = vector.load %arg7[%c17, %c0_1] : memref<18x128xf32, #tpu.memory_space<vmem>>, vector<1x128xf32>
    tpu.vector_store %arg7[%c17, %c0_1], %0 {strides = array<i32>} : memref<18x128xf32, #tpu.memory_space<vmem>>, vector<1x128xf32>,
    %c0_2 = arith.constant 0 : index
    %c0_3 = arith.constant 0 : index
    %c0_4 = arith.constant 0 : index
    %3 = vector.load %arg1[%c0_2, %c0_3, %c0_4] : memref<1x16x128xf32, #tpu.memory_space<vmem>>, vector<1x16x128xf32>
    %4 = vector.shape_cast %3 : vector<1x16x128xf32> to vector<16x128xf32>
    %c1 = arith.constant 1 : index
    %c0_5 = arith.constant 0 : index
    %5 = vector.load %arg7[%c1, %c0_5] : memref<18x128xf32, #tpu.memory_space<vmem>>, vector<16x128xf32>
    tpu.vector_store %arg7[%c1, %c0_5], %4 {strides = array<i32>} : memref<18x128xf32, #tpu.memory_space<vmem>>, vector<16x128xf32>,
    %c0_6 = arith.constant 0 : index
    %c0_7 = arith.constant 0 : index
    %6 = vector.load %arg7[%c0_6, %c0_7] : memref<18x128xf32, #tpu.memory_space<vmem>>, vector<16x128xf32>
    %7 = arith.truncf %6 : vector<16x128xf32> to vector<16x128xbf16>
    %c0_8 = arith.constant 0 : index
    %c0_9 = arith.constant 0 : index
    %c0_10 = arith.constant 0 : index
    %8 = vector.load %arg2[%c0_8, %c0_9, %c0_10] : memref<3x128x128xbf16, #tpu.memory_space<vmem>>, vector<1x128x128xbf16>
    %9 = vector.shape_cast %8 : vector<1x128x128xbf16> to vector<128x128xbf16>
    %cst_11 = arith.constant dense<0.000000e+00> : vector<16x128xf32>
    %10 = tpu.matmul %7, %9, %cst_11 {dimension_numbers = #tpu.dot_dimension_numbers<[1], [0], [0], [1], [0, 0, 1, 1], [], []>} : vector<16x128xbf16>, vector<128x128xbf16>, vector<16x128xf32> -> vector<16x128xf32>
    %c1_12 = arith.constant 1 : index
    %c0_13 = arith.constant 0 : index
    %11 = vector.load %arg7[%c1_12, %c0_13] : memref<18x128xf32, #tpu.memory_space<vmem>>, vector<16x128xf32>
    %12 = arith.truncf %11 : vector<16x128xf32> to vector<16x128xbf16>
    %c1_14 = arith.constant 1 : index
    %c0_15 = arith.constant 0 : index
    %c0_16 = arith.constant 0 : index
    %13 = vector.load %arg2[%c1_14, %c0_15, %c0_16] : memref<3x128x128xbf16, #tpu.memory_space<vmem>>, vector<1x128x128xbf16>
    %14 = vector.shape_cast %13 : vector<1x128x128xbf16> to vector<128x128xbf16>
    %cst_17 = arith.constant dense<0.000000e+00> : vector<16x128xf32>
    %15 = tpu.matmul %12, %14, %cst_17 {dimension_numbers = #tpu.dot_dimension_numbers<[1], [0], [0], [1], [0, 0, 1, 1], [], []>} : vector<16x128xbf16>, vector<128x128xbf16>, vector<16x128xf32> -> vector<16x128xf32>
    %16 = arith.addf %10, %15 : vector<16x128xf32>
    %c2 = arith.constant 2 : index
    %c0_18 = arith.constant 0 : index
    %17 = vector.load %arg7[%c2, %c0_18] : memref<18x128xf32, #tpu.memory_space<vmem>>, vector<16x128xf32>
    %18 = arith.truncf %17 : vector<16x128xf32> to vector<16x128xbf16>
    %c2_19 = arith.constant 2 : index
    %c0_20 = arith.constant 0 : index
    %c0_21 = arith.constant 0 : index
    %19 = vector.load %arg2[%c2_19, %c0_20, %c0_21] : memref<3x128x128xbf16, #tpu.memory_space<vmem>>, vector<1x128x128xbf16>
    %20 = vector.shape_cast %19 : vector<1x128x128xbf16> to vector<128x128xbf16>
    %cst_22 = arith.constant dense<0.000000e+00> : vector<16x128xf32>
    %21 = tpu.matmul %18, %20, %cst_22 {dimension_numbers = #tpu.dot_dimension_numbers<[1], [0], [0], [1], [0, 0, 1, 1], [], []>} : vector<16x128xbf16>, vector<128x128xbf16>, vector<16x128xf32> -> vector<16x128xf32>
    %22 = arith.addf %16, %21 : vector<16x128xf32>
    %c0_23 = arith.constant 0 : index
    %c0_24 = arith.constant 0 : index
    %23 = vector.load %arg3[%c0_23, %c0_24] : memref<1x128xf32, #tpu.memory_space<vmem>>, vector<1x128xf32>
    %24 = vector.broadcast %23 : vector<1x128xf32> to vector<16x128xf32>
    %25 = arith.addf %22, %24 : vector<16x128xf32>
    %cst_25 = arith.constant 0.000000e+00 : f32
    %26 = vector.broadcast %cst_25 : f32 to vector<16x128xf32>
    %27 = arith.maximumf %25, %26 : vector<16x128xf32>
    %c1_26 = arith.constant 1 : index
    %c0_27 = arith.constant 0 : index
    %28 = vector.load %arg7[%c1_26, %c0_27] : memref<18x128xf32, #tpu.memory_space<vmem>>, vector<16x128xf32>
    tpu.vector_store %arg7[%c1_26, %c0_27], %27 {strides = array<i32>} : memref<18x128xf32, #tpu.memory_space<vmem>>, vector<16x128xf32>,
    %c0_28 = arith.constant 0 : index
    %c0_29 = arith.constant 0 : index
    %29 = vector.load %arg7[%c0_28, %c0_29] : memref<18x128xf32, #tpu.memory_space<vmem>>, vector<16x128xf32>
    %30 = arith.truncf %29 : vector<16x128xf32> to vector<16x128xbf16>
    %c0_30 = arith.constant 0 : index
    %c0_31 = arith.constant 0 : index
    %c0_32 = arith.constant 0 : index
    %31 = vector.load %arg4[%c0_30, %c0_31, %c0_32] : memref<3x128x128xbf16, #tpu.memory_space<vmem>>, vector<1x128x128xbf16>
    %32 = vector.shape_cast %31 : vector<1x128x128xbf16> to vector<128x128xbf16>
    %cst_33 = arith.constant dense<0.000000e+00> : vector<16x128xf32>
    %33 = tpu.matmul %30, %32, %cst_33 {dimension_numbers = #tpu.dot_dimension_numbers<[1], [0], [0], [1], [0, 0, 1, 1], [], []>} : vector<16x128xbf16>, vector<128x128xbf16>, vector<16x128xf32> -> vector<16x128xf32>
    %c1_34 = arith.constant 1 : index
    %c0_35 = arith.constant 0 : index
    %34 = vector.load %arg7[%c1_34, %c0_35] : memref<18x128xf32, #tpu.memory_space<vmem>>, vector<16x128xf32>
    %35 = arith.truncf %34 : vector<16x128xf32> to vector<16x128xbf16>
    %c1_36 = arith.constant 1 : index
    %c0_37 = arith.constant 0 : index
    %c0_38 = arith.constant 0 : index
    %36 = vector.load %arg4[%c1_36, %c0_37, %c0_38] : memref<3x128x128xbf16, #tpu.memory_space<vmem>>, vector<1x128x128xbf16>
    %37 = vector.shape_cast %36 : vector<1x128x128xbf16> to vector<128x128xbf16>
    %cst_39 = arith.constant dense<0.000000e+00> : vector<16x128xf32>
    %38 = tpu.matmul %35, %37, %cst_39 {dimension_numbers = #tpu.dot_dimension_numbers<[1], [0], [0], [1], [0, 0, 1, 1], [], []>} : vector<16x128xbf16>, vector<128x128xbf16>, vector<16x128xf32> -> vector<16x128xf32>
    %39 = arith.addf %33, %38 : vector<16x128xf32>
    %c2_40 = arith.constant 2 : index
    %c0_41 = arith.constant 0 : index
    %40 = vector.load %arg7[%c2_40, %c0_41] : memref<18x128xf32, #tpu.memory_space<vmem>>, vector<16x128xf32>
    %41 = arith.truncf %40 : vector<16x128xf32> to vector<16x128xbf16>
    %c2_42 = arith.constant 2 : index
    %c0_43 = arith.constant 0 : index
    %c0_44 = arith.constant 0 : index
    %42 = vector.load %arg4[%c2_42, %c0_43, %c0_44] : memref<3x128x128xbf16, #tpu.memory_space<vmem>>, vector<1x128x128xbf16>
    %43 = vector.shape_cast %42 : vector<1x128x128xbf16> to vector<128x128xbf16>
    %cst_45 = arith.constant dense<0.000000e+00> : vector<16x128xf32>
    %44 = tpu.matmul %41, %43, %cst_45 {dimension_numbers = #tpu.dot_dimension_numbers<[1], [0], [0], [1], [0, 0, 1, 1], [], []>} : vector<16x128xbf16>, vector<128x128xbf16>, vector<16x128xf32> -> vector<16x128xf32>
    %45 = arith.addf %39, %44 : vector<16x128xf32>
    %c0_46 = arith.constant 0 : index
    %c0_47 = arith.constant 0 : index
    %46 = vector.load %arg5[%c0_46, %c0_47] : memref<1x128xf32, #tpu.memory_space<vmem>>, vector<1x128xf32>
    %47 = vector.broadcast %46 : vector<1x128xf32> to vector<16x128xf32>
    %48 = arith.addf %45, %47 : vector<16x128xf32>
    %49 = arith.addf %48, %4 : vector<16x128xf32>
    %cst_48 = arith.constant 0.000000e+00 : f32
    %50 = vector.broadcast %cst_48 : f32 to vector<16x128xf32>
    %51 = arith.maximumf %49, %50 : vector<16x128xf32>
    %c0_49 = arith.constant 0 : index
    %c0_50 = arith.constant 0 : index
    %c0_51 = arith.constant 0 : index
    %52 = vector.load %arg6[%c0_49, %c0_50, %c0_51] : memref<1x16x128xf32, #tpu.memory_space<vmem>>, vector<1x16x128xf32>
    %53 = vector.shape_cast %52 : vector<1x16x128xf32> to vector<16x128xf32>
    %54 = vector.shape_cast %51 : vector<16x128xf32> to vector<1x16x128xf32>
    tpu.vector_store %arg6[%c0_49, %c0_50, %c0_51], %54 {strides = array<i32>} : memref<1x16x128xf32, #tpu.memory_space<vmem>>, vector<1x16x128xf32>,
    return
  }
  func.func @transform_0(%arg0: i32) -> (i32, i32, i32) {
    %c0_i32 = arith.constant 0 : i32
    %c0_i32_0 = arith.constant 0 : i32
    %c0_i32_1 = arith.constant 0 : i32
    return %arg0, %c0_i32, %c0_i32_0 : i32, i32, i32
  }
  func.func @transform_1(%arg0: i32) -> (i32, i32, i32) {
    %c0_i32 = arith.constant 0 : i32
    %c0_i32_0 = arith.constant 0 : i32
    %c0_i32_1 = arith.constant 0 : i32
    %c0_i32_2 = arith.constant 0 : i32
    return %c0_i32, %c0_i32_0, %c0_i32_1 : i32, i32, i32
  }
  func.func @transform_2(%arg0: i32) -> (i32, i32) {
    %c0_i32 = arith.constant 0 : i32
    %c0_i32_0 = arith.constant 0 : i32
    %c0_i32_1 = arith.constant 0 : i32
    return %c0_i32, %c0_i32_0 : i32, i32
  }
  func.func @transform_3(%arg0: i32) -> (i32, i32, i32) {
    %c0_i32 = arith.constant 0 : i32
    %c0_i32_0 = arith.constant 0 : i32
    %c0_i32_1 = arith.constant 0 : i32
    %c0_i32_2 = arith.constant 0 : i32
    return %c0_i32, %c0_i32_0, %c0_i32_1 : i32, i32, i32
  }
  func.func @transform_4(%arg0: i32) -> (i32, i32) {
    %c0_i32 = arith.constant 0 : i32
    %c0_i32_0 = arith.constant 0 : i32
    %c0_i32_1 = arith.constant 0 : i32
    return %c0_i32, %c0_i32_0 : i32, i32
  }
  func.func @transform_5(%arg0: i32) -> (i32, i32, i32) {
    %c0_i32 = arith.constant 0 : i32
    %c0_i32_0 = arith.constant 0 : i32
    %c0_i32_1 = arith.constant 0 : i32
    return %arg0, %c0_i32, %c0_i32_0 : i32, i32, i32
  }
}

</mosaic_0001>

<llo_original>
// kernel: basic_block_enc.1
$region0: #{basic_block_enc.1}
  #allocation0 [shape = 'u32[]', space=smem, size = 0x4, offset = 0x4, fixed_abs, tag = 'smem constant byte address 0x4 - core index']
  #allocation1 [shape = 'u32[144,128]{1,0:T(1,128)}', space=vmem, size = 0x12000, scoped, tag = 'internal scratch']
  #allocation2 [shape = 'f32[18,128]{1,0:T(8,128)}', space=vmem, size = 0x3000, scoped, tag = 'scratch operand']
  %s0 = inlined_call_operand.vmem [shape: f32[1,16,128], index: 0, kind: input, shape index: {}]
  %s1 = inlined_call_operand.vmem [shape: bf16[3,128,128], index: 1, kind: input, shape index: {}]
  %s2 = inlined_call_operand.vmem [shape: f32[1,128], index: 2, kind: input, shape index: {}]
  %s3 = inlined_call_operand.vmem [shape: bf16[3,128,128], index: 3, kind: input, shape index: {}]
  %s4 = inlined_call_operand.vmem [shape: f32[1,128], index: 4, kind: input, shape index: {}]
  %s5 = inlined_call_operand.vmem [shape: f32[1,16,128], index: 5, kind: output, shape index: {}]
  %s6 = sld [smem:[#allocation0]]
  $region30: #{basic_block_enc.1} parent=0
    _
  %s8 = ssub.s32 1, %s6
  %s9 = scalar_select 0, %s8, %s6
  // Predicated region
  $region2: #{basic_block_enc.1} parent=0 // pred_check
    _
  $region3: #{basic_block_enc.1} parent=0 // pred_check_branch
    %11 = sbr.rel (0) target = $region5
  $region4: #{basic_block_enc.1} parent=0 // pred_region
    _
  $region5: #{basic_block_enc.1} parent=0 // pred_fallthru
    _
  // Predicated region
  $region6: #{basic_block_enc.1} parent=0 // pred_check
    _
  $region7: #{basic_block_enc.1} parent=0 // pred_check_branch
    %13 = sbr.rel (0) target = $region9
  $region8: #{basic_block_enc.1} parent=0 // pred_region
    _
  $region9: #{basic_block_enc.1} parent=0 // pred_fallthru
    _
  // Predicated region
  $region10: #{basic_block_enc.1} parent=0 // pred_check
    _
  $region11: #{basic_block_enc.1} parent=0 // pred_check_branch
    %15 = sbr.rel (0) target = $region13
  $region12: #{basic_block_enc.1} parent=0 // pred_region
    _
  $region13: #{basic_block_enc.1} parent=0 // pred_fallthru
    _
  // Predicated region
  $region14: #{basic_block_enc.1} parent=0 // pred_check
    _
  $region15: #{basic_block_enc.1} parent=0 // pred_check_branch
    %17 = sbr.rel (0) target = $region17
  $region16: #{basic_block_enc.1} parent=0 // pred_region
    _
  $region17: #{basic_block_enc.1} parent=0 // pred_fallthru
    _
  // Predicated region
  $region18: #{basic_block_enc.1} parent=0 // pred_check
    _
  $region19: #{basic_block_enc.1} parent=0 // pred_check_branch
    %19 = sbr.rel (0) target = $region21
  $region20: #{basic_block_enc.1} parent=0 // pred_region
    _
  $region21: #{basic_block_enc.1} parent=0 // pred_fallthru
    _
  %21 = vst [vmem:[#allocation2] sm:$0x1] 0.0
  %22 = vst [vmem:[#allocation2 + $0x11] sm:$0x1] 0.0
  %v23 = vld [vmem:[%s0] sm:$0xff]
  %v24 = vld [vmem:[%s0 + $0x8] sm:$0xff]
  %25 = vst [vmem:[#allocation2 + $0x1] sm:$0xff] %v23
  %26 = vst [vmem:[#allocation2 + $0x9] sm:$0xff] %v24
  %v27 = vld [vmem:[#allocation2] sm:$0xff]
  %v28 = vld [vmem:[#allocation2 + $0x8] sm:$0xff]
  %v29 = vpack.c.bf16 %v28, %v27
  %v30 = vld [vmem:[%s1] sm:$0xf]
  %v31 = vld [vmem:[%s1 + $0x4] sm:$0xf]
  %v32 = vld [vmem:[%s1 + $0x8] sm:$0xf]
  %v33 = vld [vmem:[%s1 + $0xc] sm:$0xf]
  %v34 = vld [vmem:[%s1 + $0x10] sm:$0xf]
  %v35 = vld [vmem:[%s1 + $0x14] sm:$0xf]
  %v36 = vld [vmem:[%s1 + $0x18] sm:$0xf]
  %v37 = vld [vmem:[%s1 + $0x1c] sm:$0xf]
  %v38 = vld [vmem:[%s1 + $0x20] sm:$0xf]
  %v39 = vld [vmem:[%s1 + $0x24] sm:$0xf]
  %v40 = vld [vmem:[%s1 + $0x28] sm:$0xf]
  %v41 = vld [vmem:[%s1 + $0x2c] sm:$0xf]
  %v42 = vld [vmem:[%s1 + $0x30] sm:$0xf]
  %v43 = vld [vmem:[%s1 + $0x34] sm:$0xf]
  %v44 = vld [vmem:[%s1 + $0x38] sm:$0xf]
  %v45 = vld [vmem:[%s1 + $0x3c] sm:$0xf]
  %v46 = vld [vmem:[#allocation2 + $0x1] sm:$0xff]
  %v47 = vld [vmem:[#allocation2 + $0x9] sm:$0xff]
  %v48 = vpack.c.bf16 %v47, %v46
  %s49 = scalar_lea.vmem %s1, 64
  %v50 = vld [vmem:[%s49] sm:$0xf]
  %v51 = vld [vmem:[%s49 + $0x4] sm:$0xf]
  %v52 = vld [vmem:[%s49 + $0x8] sm:$0xf]
  %v53 = vld [vmem:[%s49 + $0xc] sm:$0xf]
  %v54 = vld [vmem:[%s49 + $0x10] sm:$0xf]
  %v55 = vld [vmem:[%s49 + $0x14] sm:$0xf]
  %v56 = vld [vmem:[%s49 + $0x18] sm:$0xf]
  %v57 = vld [vmem:[%s49 + $0x1c] sm:$0xf]
  %v58 = vld [vmem:[%s49 + $0x20] sm:$0xf]
  %v59 = vld [vmem:[%s49 + $0x24] sm:$0xf]
  %v60 = vld [vmem:[%s49 + $0x28] sm:$0xf]
  %v61 = vld [vmem:[%s49 + $0x2c] sm:$0xf]
  %v62 = vld [vmem:[%s49 + $0x30] sm:$0xf]
  %v63 = vld [vmem:[%s49 + $0x34] sm:$0xf]
  %v64 = vld [vmem:[%s49 + $0x38] sm:$0xf]
  %v65 = vld [vmem:[%s49 + $0x3c] sm:$0xf]
  %v82 = vunpack.c.l.b16 %v50
  %v83 = vunpack.c.l.b16 %v51
  %v84 = vunpack.c.l.b16 %v52
  %v85 = vunpack.c.l.b16 %v53
  %v86 = vunpack.c.l.b16 %v54
  %v87 = vunpack.c.l.b16 %v55
  %v88 = vunpack.c.l.b16 %v56
  %v89 = vunpack.c.l.b16 %v57
  %v90 = vunpack.c.l.b16 %v58
  %v91 = vunpack.c.l.b16 %v59
  %v92 = vunpack.c.l.b16 %v60
  %v93 = vunpack.c.l.b16 %v61
  %v94 = vunpack.c.l.b16 %v62
  %v95 = vunpack.c.l.b16 %v63
  %v96 = vunpack.c.l.b16 %v64
  %v97 = vunpack.c.l.b16 %v65
  %v98 = vpack.c.b16 %v83, %v82
  %v99 = vpack.c.b16 %v85, %v84
  %v100 = vpack.c.b16 %v87, %v86
  %v101 = vpack.c.b16 %v89, %v88
  %v102 = vpack.c.b16 %v91, %v90
  %v103 = vpack.c.b16 %v93, %v92
  %v104 = vpack.c.b16 %v95, %v94
  %v105 = vpack.c.b16 %v97, %v96
  %114 = vmatprep.subr.bf16.mxu0 0
  %115 = vmatpush1.bf16.msra.mxu0 %v98
  %116 = vmatprep.subr.bf16.mxu0 0
  %117 = vmatpush1.bf16.msra.mxu0 %v99
  %118 = vmatprep.subr.bf16.mxu0 0
  %119 = vmatpush1.bf16.msra.mxu0 %v100
  %120 = vmatprep.subr.bf16.mxu0 0
  %121 = vmatpush1.bf16.msra.mxu0 %v101
  %122 = vmatprep.subr.bf16.mxu0 0
  %123 = vmatpush1.bf16.msra.mxu0 %v102
  %124 = vmatprep.subr.bf16.mxu0 0
  %125 = vmatpush1.bf16.msra.mxu0 %v103
  %126 = vmatprep.subr.bf16.mxu0 0
  %127 = vmatpush1.bf16.msra.mxu0 %v104
  %128 = vmatprep.subr.bf16.mxu0 0
  %129 = vmatpush1.bf16.msra.mxu0 %v105
  %130 = vmatprep.subr.bf16.mxu0 0
  %131 = vmatpush1.bf16.msra.mxu0 0
  %132 = vmatprep.subr.bf16.mxu0 0
  %133 = vmatpush1.bf16.msra.mxu0 0
  %134 = vmatprep.subr.bf16.mxu0 0
  %135 = vmatpush1.bf16.msra.mxu0 0
  %136 = vmatprep.subr.bf16.mxu0 0
  %137 = vmatpush1.bf16.msra.mxu0 0
  %138 = vmatprep.subr.bf16.mxu0 0
  %139 = vmatpush1.bf16.msra.mxu0 0
  %140 = vmatprep.subr.bf16.mxu0 0
  %141 = vmatpush1.bf16.msra.mxu0 0
  %142 = vmatprep.subr.bf16.mxu0 0
  %143 = vmatpush1.bf16.msra.mxu0 0
  %144 = vmatprep.subr.bf16.mxu0 0
  %145 = vmatpush1.bf16.msra.mxu0 0
  %146 = vmatprep.mubr.bf16.mxu0 0
  %147 = vmatmul.mubr.bf16.gmra.mrb[0].mxu0 %v48
  %v148 = vpop.f32.mrb[0].mxu0
  %v149 = vadd.f32 0.0, %v148
  %v150 = vpop.f32.mrb[0].mxu0
  %v151 = vpop.f32.mrb[0].mxu0
  %v152 = vadd.f32 0.0, %v151
  %v153 = vpop.f32.mrb[0].mxu0
  %154 = vdwg.mxu0
  %v171 = vunpack.c.l.b16 %v30
  %v172 = vunpack.c.l.b16 %v31
  %v173 = vunpack.c.l.b16 %v32
  %v174 = vunpack.c.l.b16 %v33
  %v175 = vunpack.c.l.b16 %v34
  %v176 = vunpack.c.l.b16 %v35
  %v177 = vunpack.c.l.b16 %v36
  %v178 = vunpack.c.l.b16 %v37
  %v179 = vunpack.c.l.b16 %v38
  %v180 = vunpack.c.l.b16 %v39
  %v181 = vunpack.c.l.b16 %v40
  %v182 = vunpack.c.l.b16 %v41
  %v183 = vunpack.c.l.b16 %v42
  %v184 = vunpack.c.l.b16 %v43
  %v185 = vunpack.c.l.b16 %v44
  %v186 = vunpack.c.l.b16 %v45
  %v187 = vpack.c.b16 %v172, %v171
  %v188 = vpack.c.b16 %v174, %v173
  %v189 = vpack.c.b16 %v176, %v175
  %v190 = vpack.c.b16 %v178, %v177
  %v191 = vpack.c.b16 %v180, %v179
  %v192 = vpack.c.b16 %v182, %v181
  %v193 = vpack.c.b16 %v184, %v183
  %v194 = vpack.c.b16 %v186, %v185
  %203 = vmatprep.subr.bf16.mxu0 0
  %204 = vmatpush1.bf16.msra.mxu0 %v187
  %205 = vmatprep.subr.bf16.mxu0 0
  %206 = vmatpush1.bf16.msra.mxu0 %v188
  %207 = vmatprep.subr.bf16.mxu0 0
  %208 = vmatpush1.bf16.msra.mxu0 %v189
  %209 = vmatprep.subr.bf16.mxu0 0
  %210 = vmatpush1.bf16.msra.mxu0 %v190
  %211 = vmatprep.subr.bf16.mxu0 0
  %212 = vmatpush1.bf16.msra.mxu0 %v191
  %213 = vmatprep.subr.bf16.mxu0 0
  %214 = vmatpush1.bf16.msra.mxu0 %v192
  %215 = vmatprep.subr.bf16.mxu0 0
  %216 = vmatpush1.bf16.msra.mxu0 %v193
  %217 = vmatprep.subr.bf16.mxu0 0
  %218 = vmatpush1.bf16.msra.mxu0 %v194
  %219 = vmatprep.subr.bf16.mxu0 0
  %220 = vmatpush1.bf16.msra.mxu0 0
  %221 = vmatprep.subr.bf16.mxu0 0
  %222 = vmatpush1.bf16.msra.mxu0 0
  %223 = vmatprep.subr.bf16.mxu0 0
  %224 = vmatpush1.bf16.msra.mxu0 0
  %225 = vmatprep.subr.bf16.mxu0 0
  %226 = vmatpush1.bf16.msra.mxu0 0
  %227 = vmatprep.subr.bf16.mxu0 0
  %228 = vmatpush1.bf16.msra.mxu0 0
  %229 = vmatprep.subr.bf16.mxu0 0
  %230 = vmatpush1.bf16.msra.mxu0 0
  %231 = vmatprep.subr.bf16.mxu0 0
  %232 = vmatpush1.bf16.msra.mxu0 0
  %233 = vmatprep.subr.bf16.mxu0 0
  %234 = vmatpush1.bf16.msra.mxu0 0
  %235 = vmatprep.mubr.bf16.mxu0 0
  %236 = vmatmul.mubr.bf16.gmra.mrb[0].mxu0 %v29
  %v237 = vpop.f32.mrb[0].mxu0
  %v238 = vadd.f32 %v149, %v237
  %v239 = vpop.f32.mrb[0].mxu0
  %v240 = vpop.f32.mrb[0].mxu0
  %v241 = vadd.f32 %v152, %v240
  %v242 = vpop.f32.mrb[0].mxu0
  %243 = vdwg.mxu0
  %v244 = vld [vmem:[#allocation2 + $0x2] sm:$0xff]
  %v245 = vld [vmem:[#allocation2 + $0xa] sm:$0xff]
  %v246 = vpack.c.bf16 %v245, %v244
  %s247 = scalar_lea.vmem %s1, 128
  %v248 = vld [vmem:[%s247] sm:$0xf]
  %v249 = vld [vmem:[%s247 + $0x4] sm:$0xf]
  %v250 = vld [vmem:[%s247 + $0x8] sm:$0xf]
  %v251 = vld [vmem:[%s247 + $0xc] sm:$0xf]
  %v252 = vld [vmem:[%s247 + $0x10] sm:$0xf]
  %v253 = vld [vmem:[%s247 + $0x14] sm:$0xf]
  %v254 = vld [vmem:[%s247 + $0x18] sm:$0xf]
  %v255 = vld [vmem:[%s247 + $0x1c] sm:$0xf]
  %v256 = vld [vmem:[%s247 + $0x20] sm:$0xf]
  %v257 = vld [vmem:[%s247 + $0x24] sm:$0xf]
  %v258 = vld [vmem:[%s247 + $0x28] sm:$0xf]
  %v259 = vld [vmem:[%s247 + $0x2c] sm:$0xf]
  %v260 = vld [vmem:[%s247 + $0x30] sm:$0xf]
  %v261 = vld [vmem:[%s247 + $0x34] sm:$0xf]
  %v262 = vld [vmem:[%s247 + $0x38] sm:$0xf]
  %v263 = vld [vmem:[%s247 + $0x3c] sm:$0xf]
  %v280 = vunpack.c.l.b16 %v248
  %v281 = vunpack.c.l.b16 %v249
  %v282 = vunpack.c.l.b16 %v250
  %v283 = vunpack.c.l.b16 %v251
  %v284 = vunpack.c.l.b16 %v252
  %v285 = vunpack.c.l.b16 %v253
  %v286 = vunpack.c.l.b16 %v254
  %v287 = vunpack.c.l.b16 %v255
  %v288 = vunpack.c.l.b16 %v256
  %v289 = vunpack.c.l.b16 %v257
  %v290 = vunpack.c.l.b16 %v258
  %v291 = vunpack.c.l.b16 %v259
  %v292 = vunpack.c.l.b16 %v260
  %v293 = vunpack.c.l.b16 %v261
  %v294 = vunpack.c.l.b16 %v262
  %v295 = vunpack.c.l.b16 %v263
  %v296 = vpack.c.b16 %v281, %v280
  %v297 = vpack.c.b16 %v283, %v282
  %v298 = vpack.c.b16 %v285, %v284
  %v299 = vpack.c.b16 %v287, %v286
  %v300 = vpack.c.b16 %v289, %v288
  %v301 = vpack.c.b16 %v291, %v290
  %v302 = vpack.c.b16 %v293, %v292
  %v303 = vpack.c.b16 %v295, %v294
  %312 = vmatprep.subr.bf16.mxu0 0
  %313 = vmatpush1.bf16.msra.mxu0 %v296
  %314 = vmatprep.subr.bf16.mxu0 0
  %315 = vmatpush1.bf16.msra.mxu0 %v297
  %316 = vmatprep.subr.bf16.mxu0 0
  %317 = vmatpush1.bf16.msra.mxu0 %v298
  %318 = vmatprep.subr.bf16.mxu0 0
  %319 = vmatpush1.bf16.msra.mxu0 %v299
  %320 = vmatprep.subr.bf16.mxu0 0
  %321 = vmatpush1.bf16.msra.mxu0 %v300
  %322 = vmatprep.subr.bf16.mxu0 0
  %323 = vmatpush1.bf16.msra.mxu0 %v301
  %324 = vmatprep.subr.bf16.mxu0 0
  %325 = vmatpush1.bf16.msra.mxu0 %v302
  %326 = vmatprep.subr.bf16.mxu0 0
  %327 = vmatpush1.bf16.msra.mxu0 %v303
  %328 = vmatprep.subr.bf16.mxu0 0
  %329 = vmatpush1.bf16.msra.mxu0 0
  %330 = vmatprep.subr.bf16.mxu0 0
  %331 = vmatpush1.bf16.msra.mxu0 0
  %332 = vmatprep.subr.bf16.mxu0 0
  %333 = vmatpush1.bf16.msra.mxu0 0
  %334 = vmatprep.subr.bf16.mxu0 0
  %335 = vmatpush1.bf16.msra.mxu0 0
  %336 = vmatprep.subr.bf16.mxu0 0
  %337 = vmatpush1.bf16.msra.mxu0 0
  %338 = vmatprep.subr.bf16.mxu0 0
  %339 = vmatpush1.bf16.msra.mxu0 0
  %340 = vmatprep.subr.bf16.mxu0 0
  %341 = vmatpush1.bf16.msra.mxu0 0
  %342 = vmatprep.subr.bf16.mxu0 0
  %343 = vmatpush1.bf16.msra.mxu0 0
  %344 = vmatprep.mubr.bf16.mxu0 0
  %345 = vmatmul.mubr.bf16.gmra.mrb[0].mxu0 %v246
  %v346 = vpop.f32.mrb[0].mxu0
  %v347 = vadd.f32 0.0, %v346
  %v348 = vpop.f32.mrb[0].mxu0
  %v349 = vpop.f32.mrb[0].mxu0
  %v350 = vadd.f32 0.0, %v349
  %v351 = vpop.f32.mrb[0].mxu0
  %352 = vdwg.mxu0
  %v353 = vadd.f32 %v238, %v347
  %v354 = vadd.f32 %v241, %v350
  %v355 = vld [vmem:[%s2] sm:$0x1]
  %v357 = vlaneseq
  %v358 = vshrl.u32 %v357, 7
  %v359 = vsub.s32 0, %v358
  %v360 = vrot.slane %v355, %v359
  %v362 = vadd.f32 %v353, %v360
  %v363 = vadd.f32 %v354, %v360
  %v364 = vmax.f32 %v362, 0.0
  %v365 = vmax.f32 %v363, 0.0
  %366 = vst [vmem:[#allocation2 + $0x1] sm:$0xff] %v364
  %367 = vst [vmem:[#allocation2 + $0x9] sm:$0xff] %v365
  %v368 = vld [vmem:[#allocation2] sm:$0xff]
  %v369 = vld [vmem:[#allocation2 + $0x8] sm:$0xff]
  %v370 = vpack.c.bf16 %v369, %v368
  %v371 = vld [vmem:[%s3] sm:$0xf]
  %v372 = vld [vmem:[%s3 + $0x4] sm:$0xf]
  %v373 = vld [vmem:[%s3 + $0x8] sm:$0xf]
  %v374 = vld [vmem:[%s3 + $0xc] sm:$0xf]
  %v375 = vld [vmem:[%s3 + $0x10] sm:$0xf]
  %v376 = vld [vmem:[%s3 + $0x14] sm:$0xf]
  %v377 = vld [vmem:[%s3 + $0x18] sm:$0xf]
  %v378 = vld [vmem:[%s3 + $0x1c] sm:$0xf]
  %v379 = vld [vmem:[%s3 + $0x20] sm:$0xf]
  %v380 = vld [vmem:[%s3 + $0x24] sm:$0xf]
  %v381 = vld [vmem:[%s3 + $0x28] sm:$0xf]
  %v382 = vld [vmem:[%s3 + $0x2c] sm:$0xf]
  %v383 = vld [vmem:[%s3 + $0x30] sm:$0xf]
  %v384 = vld [vmem:[%s3 + $0x34] sm:$0xf]
  %v385 = vld [vmem:[%s3 + $0x38] sm:$0xf]
  %v386 = vld [vmem:[%s3 + $0x3c] sm:$0xf]
  %v387 = vld [vmem:[#allocation2 + $0x1] sm:$0xff]
  %v388 = vld [vmem:[#allocation2 + $0x9] sm:$0xff]
  %v389 = vpack.c.bf16 %v388, %v387
  %s390 = scalar_lea.vmem %s3, 64
  %v391 = vld [vmem:[%s390] sm:$0xf]
  %v392 = vld [vmem:[%s390 + $0x4] sm:$0xf]
  %v393 = vld [vmem:[%s390 + $0x8] sm:$0xf]
  %v394 = vld [vmem:[%s390 + $0xc] sm:$0xf]
  %v395 = vld [vmem:[%s390 + $0x10] sm:$0xf]
  %v396 = vld [vmem:[%s390 + $0x14] sm:$0xf]
  %v397 = vld [vmem:[%s390 + $0x18] sm:$0xf]
  %v398 = vld [vmem:[%s390 + $0x1c] sm:$0xf]
  %v399 = vld [vmem:[%s390 + $0x20] sm:$0xf]
  %v400 = vld [vmem:[%s390 + $0x24] sm:$0xf]
  %v401 = vld [vmem:[%s390 + $0x28] sm:$0xf]
  %v402 = vld [vmem:[%s390 + $0x2c] sm:$0xf]
  %v403 = vld [vmem:[%s390 + $0x30] sm:$0xf]
  %v404 = vld [vmem:[%s390 + $0x34] sm:$0xf]
  %v405 = vld [vmem:[%s390 + $0x38] sm:$0xf]
  %v406 = vld [vmem:[%s390 + $0x3c] sm:$0xf]
  %v423 = vunpack.c.l.b16 %v391
  %v424 = vunpack.c.l.b16 %v392
  %v425 = vunpack.c.l.b16 %v393
  %v426 = vunpack.c.l.b16 %v394
  %v427 = vunpack.c.l.b16 %v395
  %v428 = vunpack.c.l.b16 %v396
  %v429 = vunpack.c.l.b16 %v397
  %v430 = vunpack.c.l.b16 %v398
  %v431 = vunpack.c.l.b16 %v399
  %v432 = vunpack.c.l.b16 %v400
  %v433 = vunpack.c.l.b16 %v401
  %v434 = vunpack.c.l.b16 %v402
  %v435 = vunpack.c.l.b16 %v403
  %v436 = vunpack.c.l.b16 %v404
  %v437 = vunpack.c.l.b16 %v405
  %v438 = vunpack.c.l.b16 %v406
  %v439 = vpack.c.b16 %v424, %v423
  %v440 = vpack.c.b16 %v426, %v425
  %v441 = vpack.c.b16 %v428, %v427
  %v442 = vpack.c.b16 %v430, %v429
  %v443 = vpack.c.b16 %v432, %v431
  %v444 = vpack.c.b16 %v434, %v433
  %v445 = vpack.c.b16 %v436, %v435
  %v446 = vpack.c.b16 %v438, %v437
  %455 = vmatprep.subr.bf16.mxu0 0
  %456 = vmatpush1.bf16.msra.mxu0 %v439
  %457 = vmatprep.subr.bf16.mxu0 0
  %458 = vmatpush1.bf16.msra.mxu0 %v440
  %459 = vmatprep.subr.bf16.mxu0 0
  %460 = vmatpush1.bf16.msra.mxu0 %v441
  %461 = vmatprep.subr.bf16.mxu0 0
  %462 = vmatpush1.bf16.msra.mxu0 %v442
  %463 = vmatprep.subr.bf16.mxu0 0
  %464 = vmatpush1.bf16.msra.mxu0 %v443
  %465 = vmatprep.subr.bf16.mxu0 0
  %466 = vmatpush1.bf16.msra.mxu0 %v444
  %467 = vmatprep.subr.bf16.mxu0 0
  %468 = vmatpush1.bf16.msra.mxu0 %v445
  %469 = vmatprep.subr.bf16.mxu0 0
  %470 = vmatpush1.bf16.msra.mxu0 %v446
  %471 = vmatprep.subr.bf16.mxu0 0
  %472 = vmatpush1.bf16.msra.mxu0 0
  %473 = vmatprep.subr.bf16.mxu0 0
  %474 = vmatpush1.bf16.msra.mxu0 0
  %475 = vmatprep.subr.bf16.mxu0 0
  %476 = vmatpush1.bf16.msra.mxu0 0
  %477 = vmatprep.subr.bf16.mxu0 0
  %478 = vmatpush1.bf16.msra.mxu0 0
  %479 = vmatprep.subr.bf16.mxu0 0
  %480 = vmatpush1.bf16.msra.mxu0 0
  %481 = vmatprep.subr.bf16.mxu0 0
  %482 = vmatpush1.bf16.msra.mxu0 0
  %483 = vmatprep.subr.bf16.mxu0 0
  %484 = vmatpush1.bf16.msra.mxu0 0
  %485 = vmatprep.subr.bf16.mxu0 0
  %486 = vmatpush1.bf16.msra.mxu0 0
  %487 = vmatprep.mubr.bf16.mxu0 0
  %488 = vmatmul.mubr.bf16.gmra.mrb[0].mxu0 %v389
  %v489 = vpop.f32.mrb[0].mxu0
  %v490 = vadd.f32 0.0, %v489
  %v491 = vpop.f32.mrb[0].mxu0
  %v492 = vpop.f32.mrb[0].mxu0
  %v493 = vadd.f32 0.0, %v492
  %v494 = vpop.f32.mrb[0].mxu0
  %495 = vdwg.mxu0
  %v512 = vunpack.c.l.b16 %v371
  %v513 = vunpack.c.l.b16 %v372
  %v514 = vunpack.c.l.b16 %v373
  %v515 = vunpack.c.l.b16 %v374
  %v516 = vunpack.c.l.b16 %v375
  %v517 = vunpack.c.l.b16 %v376
  %v518 = vunpack.c.l.b16 %v377
  %v519 = vunpack.c.l.b16 %v378
  %v520 = vunpack.c.l.b16 %v379
  %v521 = vunpack.c.l.b16 %v380
  %v522 = vunpack.c.l.b16 %v381
  %v523 = vunpack.c.l.b16 %v382
  %v524 = vunpack.c.l.b16 %v383
  %v525 = vunpack.c.l.b16 %v384
  %v526 = vunpack.c.l.b16 %v385
  %v527 = vunpack.c.l.b16 %v386
  %v528 = vpack.c.b16 %v513, %v512
  %v529 = vpack.c.b16 %v515, %v514
  %v530 = vpack.c.b16 %v517, %v516
  %v531 = vpack.c.b16 %v519, %v518
  %v532 = vpack.c.b16 %v521, %v520
  %v533 = vpack.c.b16 %v523, %v522
  %v534 = vpack.c.b16 %v525, %v524
  %v535 = vpack.c.b16 %v527, %v526
  %544 = vmatprep.subr.bf16.mxu0 0
  %545 = vmatpush1.bf16.msra.mxu0 %v528
  %546 = vmatprep.subr.bf16.mxu0 0
  %547 = vmatpush1.bf16.msra.mxu0 %v529
  %548 = vmatprep.subr.bf16.mxu0 0
  %549 = vmatpush1.bf16.msra.mxu0 %v530
  %550 = vmatprep.subr.bf16.mxu0 0
  %551 = vmatpush1.bf16.msra.mxu0 %v531
  %552 = vmatprep.subr.bf16.mxu0 0
  %553 = vmatpush1.bf16.msra.mxu0 %v532
  %554 = vmatprep.subr.bf16.mxu0 0
  %555 = vmatpush1.bf16.msra.mxu0 %v533
  %556 = vmatprep.subr.bf16.mxu0 0
  %557 = vmatpush1.bf16.msra.mxu0 %v534
  %558 = vmatprep.subr.bf16.mxu0 0
  %559 = vmatpush1.bf16.msra.mxu0 %v535
  %560 = vmatprep.subr.bf16.mxu0 0
  %561 = vmatpush1.bf16.msra.mxu0 0
  %562 = vmatprep.subr.bf16.mxu0 0
  %563 = vmatpush1.bf16.msra.mxu0 0
  %564 = vmatprep.subr.bf16.mxu0 0
  %565 = vmatpush1.bf16.msra.mxu0 0
  %566 = vmatprep.subr.bf16.mxu0 0
  %567 = vmatpush1.bf16.msra.mxu0 0
  %568 = vmatprep.subr.bf16.mxu0 0
  %569 = vmatpush1.bf16.msra.mxu0 0
  %570 = vmatprep.subr.bf16.mxu0 0
  %571 = vmatpush1.bf16.msra.mxu0 0
  %572 = vmatprep.subr.bf16.mxu0 0
  %573 = vmatpush1.bf16.msra.mxu0 0
  %574 = vmatprep.subr.bf16.mxu0 0
  %575 = vmatpush1.bf16.msra.mxu0 0
  %576 = vmatprep.mubr.bf16.mxu0 0
  %577 = vmatmul.mubr.bf16.gmra.mrb[0].mxu0 %v370
  %v578 = vpop.f32.mrb[0].mxu0
  %v579 = vadd.f32 %v490, %v578
  %v580 = vpop.f32.mrb[0].mxu0
  %v581 = vpop.f32.mrb[0].mxu0
  %v582 = vadd.f32 %v493, %v581
  %v583 = vpop.f32.mrb[0].mxu0
  %584 = vdwg.mxu0
  %v585 = vld [vmem:[#allocation2 + $0x2] sm:$0xff]
  %v586 = vld [vmem:[#allocation2 + $0xa] sm:$0xff]
  %v587 = vpack.c.bf16 %v586, %v585
  %s588 = scalar_lea.vmem %s3, 128
  %v589 = vld [vmem:[%s588] sm:$0xf]
  %v590 = vld [vmem:[%s588 + $0x4] sm:$0xf]
  %v591 = vld [vmem:[%s588 + $0x8] sm:$0xf]
  %v592 = vld [vmem:[%s588 + $0xc] sm:$0xf]
  %v593 = vld [vmem:[%s588 + $0x10] sm:$0xf]
  %v594 = vld [vmem:[%s588 + $0x14] sm:$0xf]
  %v595 = vld [vmem:[%s588 + $0x18] sm:$0xf]
  %v596 = vld [vmem:[%s588 + $0x1c] sm:$0xf]
  %v597 = vld [vmem:[%s588 + $0x20] sm:$0xf]
  %v598 = vld [vmem:[%s588 + $0x24] sm:$0xf]
  %v599 = vld [vmem:[%s588 + $0x28] sm:$0xf]
  %v600 = vld [vmem:[%s588 + $0x2c] sm:$0xf]
  %v601 = vld [vmem:[%s588 + $0x30] sm:$0xf]
  %v602 = vld [vmem:[%s588 + $0x34] sm:$0xf]
  %v603 = vld [vmem:[%s588 + $0x38] sm:$0xf]
  %v604 = vld [vmem:[%s588 + $0x3c] sm:$0xf]
  %v621 = vunpack.c.l.b16 %v589
  %v622 = vunpack.c.l.b16 %v590
  %v623 = vunpack.c.l.b16 %v591
  %v624 = vunpack.c.l.b16 %v592
  %v625 = vunpack.c.l.b16 %v593
  %v626 = vunpack.c.l.b16 %v594
  %v627 = vunpack.c.l.b16 %v595
  %v628 = vunpack.c.l.b16 %v596
  %v629 = vunpack.c.l.b16 %v597
  %v630 = vunpack.c.l.b16 %v598
  %v631 = vunpack.c.l.b16 %v599
  %v632 = vunpack.c.l.b16 %v600
  %v633 = vunpack.c.l.b16 %v601
  %v634 = vunpack.c.l.b16 %v602
  %v635 = vunpack.c.l.b16 %v603
  %v636 = vunpack.c.l.b16 %v604
  %v637 = vpack.c.b16 %v622, %v621
  %v638 = vpack.c.b16 %v624, %v623
  %v639 = vpack.c.b16 %v626, %v625
  %v640 = vpack.c.b16 %v628, %v627
  %v641 = vpack.c.b16 %v630, %v629
  %v642 = vpack.c.b16 %v632, %v631
  %v643 = vpack.c.b16 %v634, %v633
  %v644 = vpack.c.b16 %v636, %v635
  %653 = vmatprep.subr.bf16.mxu0 0
  %654 = vmatpush1.bf16.msra.mxu0 %v637
  %655 = vmatprep.subr.bf16.mxu0 0
  %656 = vmatpush1.bf16.msra.mxu0 %v638
  %657 = vmatprep.subr.bf16.mxu0 0
  %658 = vmatpush1.bf16.msra.mxu0 %v639
  %659 = vmatprep.subr.bf16.mxu0 0
  %660 = vmatpush1.bf16.msra.mxu0 %v640
  %661 = vmatprep.subr.bf16.mxu0 0
  %662 = vmatpush1.bf16.msra.mxu0 %v641
  %663 = vmatprep.subr.bf16.mxu0 0
  %664 = vmatpush1.bf16.msra.mxu0 %v642
  %665 = vmatprep.subr.bf16.mxu0 0
  %666 = vmatpush1.bf16.msra.mxu0 %v643
  %667 = vmatprep.subr.bf16.mxu0 0
  %668 = vmatpush1.bf16.msra.mxu0 %v644
  %669 = vmatprep.subr.bf16.mxu0 0
  %670 = vmatpush1.bf16.msra.mxu0 0
  %671 = vmatprep.subr.bf16.mxu0 0
  %672 = vmatpush1.bf16.msra.mxu0 0
  %673 = vmatprep.subr.bf16.mxu0 0
  %674 = vmatpush1.bf16.msra.mxu0 0
  %675 = vmatprep.subr.bf16.mxu0 0
  %676 = vmatpush1.bf16.msra.mxu0 0
  %677 = vmatprep.subr.bf16.mxu0 0
  %678 = vmatpush1.bf16.msra.mxu0 0
  %679 = vmatprep.subr.bf16.mxu0 0
  %680 = vmatpush1.bf16.msra.mxu0 0
  %681 = vmatprep.subr.bf16.mxu0 0
  %682 = vmatpush1.bf16.msra.mxu0 0
  %683 = vmatprep.subr.bf16.mxu0 0
  %684 = vmatpush1.bf16.msra.mxu0 0
  %685 = vmatprep.mubr.bf16.mxu0 0
  %686 = vmatmul.mubr.bf16.gmra.mrb[0].mxu0 %v587
  %v687 = vpop.f32.mrb[0].mxu0
  %v688 = vadd.f32 0.0, %v687
  %v689 = vpop.f32.mrb[0].mxu0
  %v690 = vpop.f32.mrb[0].mxu0
  %v691 = vadd.f32 0.0, %v690
  %v692 = vpop.f32.mrb[0].mxu0
  %693 = vdwg.mxu0
  %v694 = vadd.f32 %v579, %v688
  %v695 = vadd.f32 %v582, %v691
  %v696 = vld [vmem:[%s4] sm:$0x1]
  %v698 = vlaneseq
  %v699 = vshrl.u32 %v698, 7
  %v700 = vsub.s32 0, %v699
  %v701 = vrot.slane %v696, %v700
  %v703 = vadd.f32 %v694, %v701
  %v704 = vadd.f32 %v695, %v701
  %v705 = vadd.f32 %v703, %v23
  %v706 = vadd.f32 %v704, %v24
  %v707 = vmax.f32 %v705, 0.0
  %v708 = vmax.f32 %v706, 0.0
  %709 = vst [vmem:[%s5] sm:$0xff] %v707
  %710 = vst [vmem:[%s5 + $0x8] sm:$0xff] %v708
  // Predicated region
  $region22: #{basic_block_enc.1} parent=0 // pred_check
    _
  $region23: #{basic_block_enc.1} parent=0 // pred_check_branch
    %712 = sbr.rel (0) target = $region25
  $region24: #{basic_block_enc.1} parent=0 // pred_region
    _
  $region25: #{basic_block_enc.1} parent=0 // pred_fallthru
    _
  // Predicated region
  $region26: #{basic_block_enc.1} parent=0 // pred_check
    _
  $region27: #{basic_block_enc.1} parent=0 // pred_check_branch
    %714 = sbr.rel (0) target = $region29
  $region28: #{basic_block_enc.1} parent=0 // pred_region
    _
  $region29: #{basic_block_enc.1} parent=0 // pred_fallthru
    _

</llo_original>
